<compile_context>
chip_gen: v6e
topology: v6e:2x2x1
jax: 0.10.0
libtpu: 0.0.40
codegen_flags: <defaults>
</compile_context>

<pallas_src>
import jax
import jax.numpy as jnp
from jax.experimental import pallas as pl
from jax.experimental.pallas import tpu as pltpu


def _get_loss_block_kernel(pred_ref, target_ref, trans_ref, picked_ref, fro_ref):
    pred = pred_ref[...].astype(jnp.float32)      # (Bb, C) log-probs
    tgt = target_ref[...]                         # (Bb, 1) int32
    trans = trans_ref[...]                        # (Bb, D, D) in input dtype

    bb, c = pred.shape
    d = trans.shape[1]

    # ---- NLL pick: picked[i] = pred[i, target[i]]  (one-hot; C is small) ----
    col_ids = jax.lax.broadcasted_iota(jnp.int32, (bb, c), 1)
    one_hot = (col_ids == tgt).astype(jnp.float32)            # (Bb,1) broadcasts over C
    picked_ref[...] = jnp.sum(pred * one_hot, axis=1, keepdims=True)

    # ---- per-sample || A A^T - I ||_F  via  ||A A^T||_F^2 - 2*tr(A A^T) + D ----
    mm = jnp.einsum('bij,bkj->bik', trans, trans,
                    preferred_element_type=jnp.float32)       # (Bb, D, D) f32 (MXU)
    t32 = trans.astype(jnp.float32)
    tr_aat = jnp.sum(jnp.sum(t32 * t32, axis=2), axis=1, keepdims=True)  # (Bb,1) = tr(AA^T)
    mm_sq = jnp.sum(jnp.sum(mm * mm, axis=2), axis=1, keepdims=True)     # (Bb,1) = ||AA^T||_F^2
    per_b = mm_sq - 2.0 * tr_aat + jnp.float32(d)
    fro_ref[...] = jnp.sqrt(jnp.maximum(per_b, 0.0))          # clamp: algebraic form can go -eps


def get_loss(pred, target, trans_feat, mat_diff_loss_scale=0.001, block_b=None):
    """Pallas equivalent of the PyTorch get_loss.forward."""
    B, C = pred.shape
    D = trans_feat.shape[1]
    itemsize = jnp.dtype(trans_feat.dtype).itemsize

    # --- pick a batch block: ~4 MiB of trans_feat per block (double-buffered -> ~8 MiB live),
    #     multiple of 8 sublanes, capped, and never larger than the (8-rounded) batch. ---
    if block_b is None:
        blk = (4 * 1024 * 1024) // max(D * D * itemsize, 1)
        block_b = int(max(8, min(512, (blk // 8) * 8)))
    block_b = int(max(8, (block_b // 8) * 8))
    b_ceil8 = ((B + 7) // 8) * 8
    block_b = min(block_b, b_ceil8)

    num_blocks = (B + block_b - 1) // block_b
    b_pad = num_blocks * block_b

    target2d = target.astype(jnp.int32).reshape(B, 1)
    if b_pad != B:
        pred = jnp.pad(pred, ((0, b_pad - B), (0, 0)))
        target2d = jnp.pad(target2d, ((0, b_pad - B), (0, 0)))
        trans_feat = jnp.pad(trans_feat, ((0, b_pad - B), (0, 0), (0, 0)))

    picked, fro = pl.pallas_call(
        _get_loss_block_kernel,
        grid=(num_blocks,),
        in_specs=[
            pl.BlockSpec((block_b, C), lambda i: (i, 0)),
            pl.BlockSpec((block_b, 1), lambda i: (i, 0)),
            pl.BlockSpec((block_b, D, D), lambda i: (i, 0, 0)),
        ],
        out_specs=(
            pl.BlockSpec((block_b, 1), lambda i: (i, 0)),
            pl.BlockSpec((block_b, 1), lambda i: (i, 0)),
        ),
        out_shape=(
            jax.ShapeDtypeStruct((b_pad, 1), jnp.float32),
            jax.ShapeDtypeStruct((b_pad, 1), jnp.float32),
        ),
        compiler_params=pltpu.CompilerParams(
            dimension_semantics=("parallel",),
            vmem_limit_bytes=32 * 1024 * 1024,
        ),
    )(pred, target2d, trans_feat)

    # --- stage 2: trivial final reduction in plain JAX (drops padded rows) ---
    picked = picked[:B, 0]
    fro = fro[:B, 0]
    nll = -jnp.mean(picked)
    mat_diff_loss = jnp.mean(fro)
    total = nll + mat_diff_loss * jnp.asarray(mat_diff_loss_scale, jnp.float32)
    return total.astype(jnp.float32)


def _reference_loss(pred, target, trans_feat, scale=0.001):
    # pure-JAX reference mirroring the PyTorch module
    B = pred.shape[0]
    nll = -jnp.mean(pred[jnp.arange(B), target])
    D = trans_feat.shape[1]
    mm = jnp.einsum('bij,bkj->bik', trans_feat, trans_feat)
    diff = mm - jnp.eye(D, dtype=jnp.float32)[None]
    fro = jnp.sqrt(jnp.sum(diff * diff, axis=(1, 2)))
    return nll + jnp.mean(fro) * scale


if __name__ == "__main__":
    key = jax.random.PRNGKey(0)
    k1, k2, k3 = jax.random.split(key, 3)

    B, C, D = 24, 16, 16
    logits = jax.random.normal(k1, (B, C), dtype=jnp.float32)
    pred = jax.nn.log_softmax(logits, axis=-1)            # log-probabilities, as NLLLoss expects
    target = jax.random.randint(k2, (B,), 0, C, dtype=jnp.int32)
    trans_feat = jax.random.normal(k3, (B, D, D), dtype=jnp.float32) * 0.1

    ref = _reference_loss(pred, target, trans_feat, 0.001)

    # multi-block grid (exercises the batch tiling / parallel axis)
    loss_tiled = jax.block_until_ready(
        get_loss(pred, target, trans_feat, mat_diff_loss_scale=0.001, block_b=8))
    assert jnp.allclose(loss_tiled, ref, rtol=1e-4, atol=1e-4), (loss_tiled, ref)

    # auto-sized block (single block at this small demo shape)
    loss_auto = jax.block_until_ready(
        get_loss(pred, target, trans_feat, mat_diff_loss_scale=0.001))
    assert jnp.allclose(loss_auto, ref, rtol=1e-4, atol=1e-4), (loss_auto, ref)

    print("KERNEL_OK")
</pallas_src>

<mosaic_0001>
module attributes {stable_mosaic.version = 11 : i64} {
  func.func @_get_loss_block_kernel(%arg0: i32, %arg1: memref<8x16xf32, #tpu.memory_space<vmem>>, %arg2: memref<8x1xi32, #tpu.memory_space<vmem>>, %arg3: memref<8x16x16xf32, #tpu.memory_space<vmem>>, %arg4: memref<8x1xf32, #tpu.memory_space<vmem>>, %arg5: memref<8x1xf32, #tpu.memory_space<vmem>>) attributes {dimension_semantics = [#tpu.dimension_semantics<parallel>], iteration_bounds = array<i64: 3>, scalar_prefetch = 0 : i64, scratch_operands = 0 : i64, tpu.core_type = #tpu.core_type<tc>, window_params = [{transform_indices = @transform_0, window_bounds = array<i64: 8, 16>}, {transform_indices = @transform_1, window_bounds = array<i64: 8, 1>}, {transform_indices = @transform_2, window_bounds = array<i64: 8, 16, 16>}, {transform_indices = @transform_3, window_bounds = array<i64: 8, 1>}, {transform_indices = @transform_4, window_bounds = array<i64: 8, 1>}]} {
    %c0 = arith.constant 0 : index
    %c0_0 = arith.constant 0 : index
    %0 = vector.load %arg1[%c0, %c0_0] : memref<8x16xf32, #tpu.memory_space<vmem>>, vector<8x16xf32>
    %c0_1 = arith.constant 0 : index
    %c0_2 = arith.constant 0 : index
    %1 = vector.load %arg2[%c0_1, %c0_2] : memref<8x1xi32, #tpu.memory_space<vmem>>, vector<8x1xi32>
    %c0_3 = arith.constant 0 : index
    %c0_4 = arith.constant 0 : index
    %c0_5 = arith.constant 0 : index
    %2 = vector.load %arg3[%c0_3, %c0_4, %c0_5] : memref<8x16x16xf32, #tpu.memory_space<vmem>>, vector<8x16x16xf32>
    %3 = tpu.iota {dimensions = array<i32: 1>} : vector<8x16xi32>
    %4 = vector.broadcast %1 : vector<8x1xi32> to vector<8x16xi32>
    %5 = arith.cmpi eq, %3, %4 : vector<8x16xi32>
    %6 = arith.extui %5 : vector<8x16xi1> to vector<8x16xi32>
    %7 = arith.sitofp %6 : vector<8x16xi32> to vector<8x16xf32>
    %8 = arith.mulf %0, %7 : vector<8x16xf32>
    %cst = arith.constant dense<0.000000e+00> : vector<8xf32>
    %9 = vector.multi_reduction <add>, %8, %cst [1] : vector<8x16xf32> to vector<8xf32>
    %10 = vector.shape_cast %9 : vector<8xf32> to vector<8x1xf32>
    %c0_6 = arith.constant 0 : index
    %c0_7 = arith.constant 0 : index
    %11 = vector.load %arg4[%c0_6, %c0_7] : memref<8x1xf32, #tpu.memory_space<vmem>>, vector<8x1xf32>
    tpu.vector_store %arg4[%c0_6, %c0_7], %10 {strides = array<i32>} : memref<8x1xf32, #tpu.memory_space<vmem>>, vector<8x1xf32>,
    "tpu.trace_start"() <{level = 10 : i32, message = "bij,bkj->bik"}> : () -> ()
    %cst_8 = arith.constant dense<0.000000e+00> : vector<8x16x16xf32>
    %12 = tpu.matmul %2, %2, %cst_8 {dimension_numbers = #tpu.dot_dimension_numbers<[2], [2], [1], [1], [0, 0, 0, 1, 1, 1], [0], [0]>} : vector<8x16x16xf32>, vector<8x16x16xf32>, vector<8x16x16xf32> -> vector<8x16x16xf32>
    "tpu.trace_stop"() : () -> ()
    %13 = arith.mulf %2, %2 : vector<8x16x16xf32>
    %cst_9 = arith.constant dense<0.000000e+00> : vector<8x16xf32>
    %14 = vector.multi_reduction <add>, %13, %cst_9 [2] : vector<8x16x16xf32> to vector<8x16xf32>
    %cst_10 = arith.constant dense<0.000000e+00> : vector<8xf32>
    %15 = vector.multi_reduction <add>, %14, %cst_10 [1] : vector<8x16xf32> to vector<8xf32>
    %16 = vector.shape_cast %15 : vector<8xf32> to vector<8x1xf32>
    %17 = arith.mulf %12, %12 : vector<8x16x16xf32>
    %cst_11 = arith.constant dense<0.000000e+00> : vector<8x16xf32>
    %18 = vector.multi_reduction <add>, %17, %cst_11 [2] : vector<8x16x16xf32> to vector<8x16xf32>
    %cst_12 = arith.constant dense<0.000000e+00> : vector<8xf32>
    %19 = vector.multi_reduction <add>, %18, %cst_12 [1] : vector<8x16xf32> to vector<8xf32>
    %20 = vector.shape_cast %19 : vector<8xf32> to vector<8x1xf32>
    %cst_13 = arith.constant 2.000000e+00 : f32
    %21 = vector.broadcast %cst_13 : f32 to vector<8x1xf32>
    %22 = arith.mulf %21, %16 : vector<8x1xf32>
    %23 = arith.subf %20, %22 : vector<8x1xf32>
    %cst_14 = arith.constant 1.600000e+01 : f32
    %24 = vector.broadcast %cst_14 : f32 to vector<8x1xf32>
    %25 = arith.addf %23, %24 : vector<8x1xf32>
    %cst_15 = arith.constant 0.000000e+00 : f32
    %26 = vector.broadcast %cst_15 : f32 to vector<8x1xf32>
    %27 = arith.maximumf %25, %26 : vector<8x1xf32>
    %28 = math.sqrt %27 : vector<8x1xf32>
    %c0_16 = arith.constant 0 : index
    %c0_17 = arith.constant 0 : index
    %29 = vector.load %arg5[%c0_16, %c0_17] : memref<8x1xf32, #tpu.memory_space<vmem>>, vector<8x1xf32>
    tpu.vector_store %arg5[%c0_16, %c0_17], %28 {strides = array<i32>} : memref<8x1xf32, #tpu.memory_space<vmem>>, vector<8x1xf32>,
    return
  }
  func.func @transform_0(%arg0: i32) -> (i32, i32) {
    %c0_i32 = arith.constant 0 : i32
    %c0_i32_0 = arith.constant 0 : i32
    return %arg0, %c0_i32 : i32, i32
  }
  func.func @transform_1(%arg0: i32) -> (i32, i32) {
    %c0_i32 = arith.constant 0 : i32
    %c0_i32_0 = arith.constant 0 : i32
    return %arg0, %c0_i32 : i32, i32
  }
  func.func @transform_2(%arg0: i32) -> (i32, i32, i32) {
    %c0_i32 = arith.constant 0 : i32
    %c0_i32_0 = arith.constant 0 : i32
    %c0_i32_1 = arith.constant 0 : i32
    return %arg0, %c0_i32, %c0_i32_0 : i32, i32, i32
  }
  func.func @transform_3(%arg0: i32) -> (i32, i32) {
    %c0_i32 = arith.constant 0 : i32
    %c0_i32_0 = arith.constant 0 : i32
    return %arg0, %c0_i32 : i32, i32
  }
  func.func @transform_4(%arg0: i32) -> (i32, i32) {
    %c0_i32 = arith.constant 0 : i32
    %c0_i32_0 = arith.constant 0 : i32
    return %arg0, %c0_i32 : i32, i32
  }
}

</mosaic_0001>

<llo_original>
// kernel: tpu_custom_call.1
$region0: #{tpu_custom_call.1}
  #allocation0 [shape = 'u32[]', space=smem, size = 0x4, offset = 0x4, fixed_abs, tag = 'smem constant byte address 0x4 - core index']
  #allocation1 [shape = 'u32[144,128]{1,0:T(1,128)}', space=vmem, size = 0x12000, scoped, tag = 'internal scratch']
  %s0 = inlined_call_operand.vmem [shape: f32[24,16], index: 0, kind: input, shape index: {}]
  %s1 = inlined_call_operand.vmem [shape: s32[24,1], index: 1, kind: input, shape index: {}]
  %s2 = inlined_call_operand.vmem [shape: f32[24,16,16], index: 2, kind: input, shape index: {}]
  %s3 = inlined_call_operand.vmem [shape: f32[24,1], index: 3, kind: output, shape index: {0}]
  %s4 = inlined_call_operand.vmem [shape: f32[24,1], index: 4, kind: output, shape index: {1}]
  %5 = xla_tuple %s3, %s4
  %s6 = sld [smem:[#allocation0]]
  $region53: #{tpu_custom_call.1} parent=0
    _
  %s8 = ssub.s32 1, %s6
  %s9 = scalar_select 0, %s8, %s6
  loop: start=0, step=1, limit=5
  $region2: #{tpu_custom_call.1} parent=0 // loop_pre_header
    _
  $region3: #{tpu_custom_call.1} parent=0 // loop_header
    %s11 = sphi 0, %s15
    %p12 = scmp.ge.s32.totalorder %s11, 5
    %s21 = sphi 0, %s23
    %s24 = sphi 0, %s21
    %s25 = sphi 0, %s24
    %s41 = sphi 0, %s25
    %s47 = sphi 0, %s49
    %s50 = sphi 0, %s47
    %s51 = sphi 0, %s50
    %s67 = sphi 0, %s51
    %s73 = sphi 0, %s75
    %s76 = sphi 0, %s73
    %s77 = sphi 0, %s76
    %s93 = sphi 0, %s77
    %s99 = sphi 0, %s101
    %s102 = sphi 0, %s99
    %s103 = sphi 0, %s102
    %s119 = sphi 0, %s103
    %s125 = sphi 0, %s127
    %s128 = sphi 0, %s125
    %s129 = sphi 0, %s128
    %s145 = sphi 0, %s129
  $region4: #{tpu_custom_call.1} parent=0 // loop_header_branch
    %14 = sbr.rel (%p12) target = $region8
  $region5: #{tpu_custom_call.1} parent=0 // loop_body
    %s16 = ssub.s32 %s11, 1
    %s17 = ssub.s32 %s11, 2
    %s18 = sadd.s32 %s11, 1
    %s19 = ssub.s32 %s11, %s18
    %p20 = scmp.eq.s32.totalorder %s19, 0
    %s22 = sadd.s32 %s21, 1
    %s23 = scalar_select %p20, %s21, %s22
    %p26 = pneg %p20
    %p27 = scmp.eq.s32.totalorder %s11, 2
    %p28 = por %p26, %p27
    %p29 = scmp.ne.s32.totalorder %s21, %s24
    %p30 = scmp.eq.s32.totalorder %s11, 0
    %p31 = por %p29, %p30
    %p32 = scmp.ne.s32.totalorder %s21, %s24
    %p33 = scmp.eq.s32.totalorder %s16, 2
    %p34 = por %p32, %p33
    %p35 = scmp.ne.s32.totalorder %s24, %s25
    %p36 = scmp.eq.s32.totalorder %s16, 0
    %p37 = por %p35, %p36
    %p38 = scmp.ne.s32.totalorder %s24, %s25
    %p39 = scmp.eq.s32.totalorder %s17, 2
    %p40 = por %p38, %p39
    %p42 = scmp.ne.s32.totalorder %s25, %s41
    %p43 = scmp.eq.s32.totalorder %s17, 0
    %p44 = por %p42, %p43
    %s45 = ssub.s32 %s11, %s18
    %p46 = scmp.eq.s32.totalorder %s45, 0
    %s48 = sadd.s32 %s47, 1
    %s49 = scalar_select %p46, %s47, %s48
    %p52 = pneg %p46
    %p53 = scmp.eq.s32.totalorder %s11, 2
    %p54 = por %p52, %p53
    %p55 = scmp.ne.s32.totalorder %s47, %s50
    %p56 = scmp.eq.s32.totalorder %s11, 0
    %p57 = por %p55, %p56
    %p58 = scmp.ne.s32.totalorder %s47, %s50
    %p59 = scmp.eq.s32.totalorder %s16, 2
    %p60 = por %p58, %p59
    %p61 = scmp.ne.s32.totalorder %s50, %s51
    %p62 = scmp.eq.s32.totalorder %s16, 0
    %p63 = por %p61, %p62
    %p64 = scmp.ne.s32.totalorder %s50, %s51
    %p65 = scmp.eq.s32.totalorder %s17, 2
    %p66 = por %p64, %p65
    %p68 = scmp.ne.s32.totalorder %s51, %s67
    %p69 = scmp.eq.s32.totalorder %s17, 0
    %p70 = por %p68, %p69
    %s71 = ssub.s32 %s11, %s18
    %p72 = scmp.eq.s32.totalorder %s71, 0
    %s74 = sadd.s32 %s73, 1
    %s75 = scalar_select %p72, %s73, %s74
    %p78 = pneg %p72
    %p79 = scmp.eq.s32.totalorder %s11, 2
    %p80 = por %p78, %p79
    %p81 = scmp.ne.s32.totalorder %s73, %s76
    %p82 = scmp.eq.s32.totalorder %s11, 0
    %p83 = por %p81, %p82
    %p84 = scmp.ne.s32.totalorder %s73, %s76
    %p85 = scmp.eq.s32.totalorder %s16, 2
    %p86 = por %p84, %p85
    %p87 = scmp.ne.s32.totalorder %s76, %s77
    %p88 = scmp.eq.s32.totalorder %s16, 0
    %p89 = por %p87, %p88
    %p90 = scmp.ne.s32.totalorder %s76, %s77
    %p91 = scmp.eq.s32.totalorder %s17, 2
    %p92 = por %p90, %p91
    %p94 = scmp.ne.s32.totalorder %s77, %s93
    %p95 = scmp.eq.s32.totalorder %s17, 0
    %p96 = por %p94, %p95
    %s97 = ssub.s32 %s11, %s18
    %p98 = scmp.eq.s32.totalorder %s97, 0
    %s100 = sadd.s32 %s99, 1
    %s101 = scalar_select %p98, %s99, %s100
    %p104 = pneg %p98
    %p105 = scmp.eq.s32.totalorder %s11, 2
    %p106 = por %p104, %p105
    %p107 = scmp.ne.s32.totalorder %s99, %s102
    %p108 = scmp.eq.s32.totalorder %s11, 0
    %p109 = por %p107, %p108
    %p110 = scmp.ne.s32.totalorder %s99, %s102
    %p111 = scmp.eq.s32.totalorder %s16, 2
    %p112 = por %p110, %p111
    %p113 = scmp.ne.s32.totalorder %s102, %s103
    %p114 = scmp.eq.s32.totalorder %s16, 0
    %p115 = por %p113, %p114
    %p116 = scmp.ne.s32.totalorder %s102, %s103
    %p117 = scmp.eq.s32.totalorder %s17, 2
    %p118 = por %p116, %p117
    %p120 = scmp.ne.s32.totalorder %s103, %s119
    %p121 = scmp.eq.s32.totalorder %s17, 0
    %p122 = por %p120, %p121
    %s123 = ssub.s32 %s11, %s18
    %p124 = scmp.eq.s32.totalorder %s123, 0
    %s126 = sadd.s32 %s125, 1
    %s127 = scalar_select %p124, %s125, %s126
    %p130 = pneg %p124
    %p131 = scmp.eq.s32.totalorder %s11, 2
    %p132 = por %p130, %p131
    %p133 = scmp.ne.s32.totalorder %s125, %s128
    %p134 = scmp.eq.s32.totalorder %s11, 0
    %p135 = por %p133, %p134
    %p136 = scmp.ne.s32.totalorder %s125, %s128
    %p137 = scmp.eq.s32.totalorder %s16, 2
    %p138 = por %p136, %p137
    %p139 = scmp.ne.s32.totalorder %s128, %s129
    %p140 = scmp.eq.s32.totalorder %s16, 0
    %p141 = por %p139, %p140
    %p142 = scmp.ne.s32.totalorder %s128, %s129
    %p143 = scmp.eq.s32.totalorder %s17, 2
    %p144 = por %p142, %p143
    %p146 = scmp.ne.s32.totalorder %s129, %s145
    %p147 = scmp.eq.s32.totalorder %s17, 0
    %p148 = por %p146, %p147
    %p149 = scmp.le.s32.totalorder 1, %s11
    %p150 = scmp.lt.s32.totalorder %s11, 4
    %p151 = pnand %p149, %p150
    %p152 = pneg %p151
    // Predicated region
    $region9: #{tpu_custom_call.1} parent=5 // pred_check
      _
    $region10: #{tpu_custom_call.1} parent=5 // pred_check_branch
      %154 = sbr.rel (%p151) target = $region12
    $region11: #{tpu_custom_call.1} parent=5 // pred_region
      %s155 = ssub.s32 %s11, 1
    $region12: #{tpu_custom_call.1} parent=5 // pred_fallthru
      _
    %p156 = scmp.lt.s32.totalorder %s11, 3
    // Predicated region
    $region13: #{tpu_custom_call.1} parent=5 // pred_check
      %p157 = pneg %p156
    $region14: #{tpu_custom_call.1} parent=5 // pred_check_branch
      %159 = sbr.rel (%p157) target = $region16
    $region15: #{tpu_custom_call.1} parent=5 // pred_region
      // Predicated region
      $region17: #{tpu_custom_call.1} parent=15 // pred_check
        %p160 = pneg %p31
      $region18: #{tpu_custom_call.1} parent=15 // pred_check_branch
        %162 = sbr.rel (%p160) target = $region20
      $region19: #{tpu_custom_call.1} parent=15 // pred_region
        %p163 = scmp.lt.s32.totalorder %s11, 2
        %s164 = scalar_select %p163, %s11, 2
        %s165 = smul.addr %s164, 8
        %s166 = scalar_lea.vmem %s0, %s165
      $region20: #{tpu_custom_call.1} parent=15 // pred_fallthru
        _
      // Predicated region
      $region21: #{tpu_custom_call.1} parent=15 // pred_check
        %p167 = pneg %p57
      $region22: #{tpu_custom_call.1} parent=15 // pred_check_branch
        %169 = sbr.rel (%p167) target = $region24
      $region23: #{tpu_custom_call.1} parent=15 // pred_region
        %p170 = scmp.lt.s32.totalorder %s11, 2
        %s171 = scalar_select %p170, %s11, 2
        %s172 = smul.addr %s171, 8
        %s173 = scalar_lea.vmem %s1, %s172
      $region24: #{tpu_custom_call.1} parent=15 // pred_fallthru
        _
      // Predicated region
      $region25: #{tpu_custom_call.1} parent=15 // pred_check
        %p174 = pneg %p83
      $region26: #{tpu_custom_call.1} parent=15 // pred_check_branch
        %176 = sbr.rel (%p174) target = $region28
      $region27: #{tpu_custom_call.1} parent=15 // pred_region
        %s177 = smul.u32 8, %s11
        %p178 = scmp.lt.s32.totalorder %s177, 23
        %s179 = scalar_select %p178, %s177, 23
        %s180 = smul.addr %s179, 2
        %s181 = smul.addr %s180, 8
        %s182 = scalar_lea.vmem %s2, %s181
        %s183 = smul.u32 8, %s11
      $region28: #{tpu_custom_call.1} parent=15 // pred_fallthru
        _
    $region16: #{tpu_custom_call.1} parent=5 // pred_fallthru
      _
    %p184 = scmp.le.s32.totalorder 1, %s11
    %p185 = scmp.lt.s32.totalorder %s11, 4
    %p186 = pnand %p184, %p185
    %p187 = pneg %p186
    // Predicated region
    $region29: #{tpu_custom_call.1} parent=5 // pred_check
      _
    $region30: #{tpu_custom_call.1} parent=5 // pred_check_branch
      %189 = sbr.rel (%p186) target = $region32
    $region31: #{tpu_custom_call.1} parent=5 // pred_region
      %s190 = ssub.s32 %s11, 1
      %p191 = scmp.lt.s32.totalorder %s16, 2
      %s192 = scalar_select %p191, %s16, 2
      %s193 = smul.addr %s192, 8
      %s194 = scalar_lea.vmem %s0, %s193
      %p195 = pneg %p37
      %p196 = pneg %p34
      %p197 = scmp.lt.s32.totalorder %s16, 2
      %s198 = scalar_select %p197, %s16, 2
      %s199 = smul.addr %s198, 8
      %s200 = scalar_lea.vmem %s1, %s199
      %p201 = pneg %p63
      %p202 = pneg %p60
      %s203 = smul.u32 8, %s16
      %p204 = scmp.lt.s32.totalorder %s203, 23
      %s205 = scalar_select %p204, %s203, 23
      %s206 = smul.addr %s205, 2
      %s207 = smul.addr %s206, 8
      %s208 = scalar_lea.vmem %s2, %s207
      %p209 = pneg %p89
      %p210 = pneg %p86
      %p211 = pneg %p115
      %p212 = pneg %p112
      %p213 = scmp.lt.s32.totalorder %s16, 2
      %s214 = scalar_select %p213, %s16, 2
      %s215 = smul.addr %s214, 8
      %s216 = scalar_lea.vmem %s3, %s215
      %p217 = pneg %p141
      %p218 = pneg %p138
      %p219 = scmp.lt.s32.totalorder %s16, 2
      %s220 = scalar_select %p219, %s16, 2
      %s221 = smul.addr %s220, 8
      %s222 = scalar_lea.vmem %s4, %s221
      %p223 = scmp.lt.s32.totalorder %s16, 2
      %s224 = scalar_select %p223, %s16, 2
      %s225 = smul.addr %s224, 8
      %s226 = scalar_lea.vmem %s0, %s225
      %p227 = scmp.lt.s32.totalorder %s16, 2
      %s228 = scalar_select %p227, %s16, 2
      %s229 = smul.addr %s228, 8
      %s230 = scalar_lea.vmem %s1, %s229
      %s231 = smul.u32 8, %s16
      %p232 = scmp.lt.s32.totalorder %s231, 23
      %s233 = scalar_select %p232, %s231, 23
      %s234 = smul.addr %s233, 2
      %s235 = smul.addr %s234, 8
      %s236 = scalar_lea.vmem %s2, %s235
      %s237 = smul.u32 8, %s16
      %p238 = scmp.lt.s32.totalorder %s16, 2
      %s239 = scalar_select %p238, %s16, 2
      %s240 = smul.addr %s239, 8
      %s241 = scalar_lea.vmem %s3, %s240
      %p242 = scmp.lt.s32.totalorder %s16, 2
      %s243 = scalar_select %p242, %s16, 2
      %s244 = smul.addr %s243, 8
      %s245 = scalar_lea.vmem %s4, %s244
      %v246 = vld [vmem:[%s226] sm:$0xff]
      %v247 = vld [vmem:[%s230] sm:$0xff]
      %v248 = vld [vmem:[%s236] sm:$0xff]
      %v249 = vld [vmem:[%s236 + $0x8] sm:$0xff]
      %v250 = vld [vmem:[%s236 + $0x10] sm:$0xff]
      %v251 = vld [vmem:[%s236 + $0x18] sm:$0xff]
      %v252 = vld [vmem:[%s236 + $0x20] sm:$0xff]
      %v253 = vld [vmem:[%s236 + $0x28] sm:$0xff]
      %v254 = vld [vmem:[%s236 + $0x30] sm:$0xff]
      %v255 = vld [vmem:[%s236 + $0x38] sm:$0xff]
      %v256 = vld [vmem:[%s236 + $0x40] sm:$0xff]
      %v257 = vld [vmem:[%s236 + $0x48] sm:$0xff]
      %v258 = vld [vmem:[%s236 + $0x50] sm:$0xff]
      %v259 = vld [vmem:[%s236 + $0x58] sm:$0xff]
      %v260 = vld [vmem:[%s236 + $0x60] sm:$0xff]
      %v261 = vld [vmem:[%s236 + $0x68] sm:$0xff]
      %v262 = vld [vmem:[%s236 + $0x70] sm:$0xff]
      %v263 = vld [vmem:[%s236 + $0x78] sm:$0xff]
      %v264 = vlaneseq
      %v265 = vand.u32 %v264, 127
      %266 = vset.pattern.permute.xlu0 0
      %267 = vperm.xlu0 %266, %v247
      %v268 = vpop.permute.xlu0 %267
      %vm269 = vcmp.eq.s32.totalorder %v265, %v268
      %v270 = vsel %vm269, 1, 0
      %v271 = vcvt.s32.f32 %v270
      %v272 = vmul.f32 %v246, %v271
      %vm273 = vcmask 130048
      %v274 = vsel %vm273, %v272, 0.0
      %275 = vadd.xlane.f32.xlu0 %v274
      %v276 = vpop.xlane.xlu0 %275
      %vm277 = vcmask 7168
      %278 = vst.msk [vmem:[%s241] sm:$0xff] %vm277, %v276
      %v280 = vsel %vm273, %v248, 0
      %v283 = vsel %vm273, %v249, 0
      %285 = vmatprep.subr.mxu0 0.0
      %286 = vmatpush1.xpose.msra.mxu0 0.0
      %287 = vmatprep.subr.mxu0 0.0
      %288 = vmatpush1.xpose.msra.mxu0 0.0
      %289 = vmatprep.subr.mxu0 0.0
      %290 = vmatpush1.xpose.msra.mxu0 0.0
      %291 = vmatprep.subr.mxu0 0.0
      %292 = vmatpush1.xpose.msra.mxu0 0.0
      %293 = vmatprep.subr.mxu0 0.0
      %294 = vmatpush1.xpose.msra.mxu0 0.0
      %295 = vmatprep.subr.mxu0 0.0
      %296 = vmatpush1.xpose.msra.mxu0 0.0
      %297 = vmatprep.subr.mxu0 0.0
      %298 = vmatpush1.xpose.msra.mxu0 0.0
      %299 = vmatprep.subr.mxu0 0.0
      %300 = vmatpush1.xpose.msra.mxu0 0.0
      %301 = vmatprep.subr.mxu0 0.0
      %302 = vmatpush1.xpose.msra.mxu0 0.0
      %303 = vmatprep.subr.mxu0 0.0
      %304 = vmatpush1.xpose.msra.mxu0 0.0
      %305 = vmatprep.subr.mxu0 0.0
      %306 = vmatpush1.xpose.msra.mxu0 0.0
      %307 = vmatprep.subr.mxu0 0.0
      %308 = vmatpush1.xpose.msra.mxu0 0.0
      %309 = vmatprep.subr.mxu0 0.0
      %310 = vmatpush1.xpose.msra.mxu0 0.0
      %311 = vmatprep.subr.mxu0 0.0
      %312 = vmatpush1.xpose.msra.mxu0 0.0
      %313 = vmatprep.subr.mxu0 0.0
      %314 = vmatpush1.xpose.msra.mxu0 %v283
      %315 = vmatprep.subr.mxu0 0.0
      %316 = vmatpush1.xpose.msra.mxu0 %v280
      %317 = vmatprep.subr.mxu0 0.0
      %318 = vmatpush2.xpose.msra.mxu0 0.0
      %319 = vmatprep.subr.mxu0 0.0
      %320 = vmatpush2.xpose.msra.mxu0 0.0
      %321 = vmatprep.subr.mxu0 0.0
      %322 = vmatpush2.xpose.msra.mxu0 0.0
      %323 = vmatprep.subr.mxu0 0.0
      %324 = vmatpush2.xpose.msra.mxu0 0.0
      %325 = vmatprep.subr.mxu0 0.0
      %326 = vmatpush2.xpose.msra.mxu0 0.0
      %327 = vmatprep.subr.mxu0 0.0
      %328 = vmatpush2.xpose.msra.mxu0 0.0
      %329 = vmatprep.subr.mxu0 0.0
      %330 = vmatpush2.xpose.msra.mxu0 0.0
      %331 = vmatprep.subr.mxu0 0.0
      %332 = vmatpush2.xpose.msra.mxu0 0.0
      %333 = vmatprep.subr.mxu0 0.0
      %334 = vmatpush2.xpose.msra.mxu0 0.0
      %335 = vmatprep.subr.mxu0 0.0
      %336 = vmatpush2.xpose.msra.mxu0 0.0
      %337 = vmatprep.subr.mxu0 0.0
      %338 = vmatpush2.xpose.msra.mxu0 0.0
      %339 = vmatprep.subr.mxu0 0.0
      %340 = vmatpush2.xpose.msra.mxu0 0.0
      %341 = vmatprep.subr.mxu0 0.0
      %342 = vmatpush2.xpose.msra.mxu0 0.0
      %343 = vmatprep.subr.mxu0 0.0
      %344 = vmatpush2.xpose.msra.mxu0 0.0
      %345 = vmatprep.subr.mxu0 0.0
      %346 = vmatpush2.xpose.msra.mxu0 0.0
      %347 = vmatprep.subr.mxu0 0.0
      %348 = vmatpush2.xpose.msra.mxu0 0.0
      %349 = vmatprep.mubr.f32.mxu0 0.0
      %350 = vmatmul.mubr.f32.gmra.mxu0 %v280
      %v351 = vpop.f32.mrf.mxu0
      %v352 = vadd.f32 0.0, %v351
      %v353 = vpop.f32.mrf.mxu0
      %354 = vmatprep.mubr.f32.mxu0 0.0
      %355 = vmatmul.mubr.f32.gmra.mxu0 %v283
      %v356 = vpop.f32.mrf.mxu0
      %v357 = vadd.f32 0.0, %v356
      %v358 = vpop.f32.mrf.mxu0
      %359 = vdwg.mxu0
      %v361 = vsel %vm273, %v250, 0
      %v364 = vsel %vm273, %v251, 0
      %366 = vmatprep.subr.mxu0 0.0
      %367 = vmatpush1.xpose.msra.mxu0 0.0
      %368 = vmatprep.subr.mxu0 0.0
      %369 = vmatpush1.xpose.msra.mxu0 0.0
      %370 = vmatprep.subr.mxu0 0.0
      %371 = vmatpush1.xpose.msra.mxu0 0.0
      %372 = vmatprep.subr.mxu0 0.0
      %373 = vmatpush1.xpose.msra.mxu0 0.0
      %374 = vmatprep.subr.mxu0 0.0
      %375 = vmatpush1.xpose.msra.mxu0 0.0
      %376 = vmatprep.subr.mxu0 0.0
      %377 = vmatpush1.xpose.msra.mxu0 0.0
      %378 = vmatprep.subr.mxu0 0.0
      %379 = vmatpush1.xpose.msra.mxu0 0.0
      %380 = vmatprep.subr.mxu0 0.0
      %381 = vmatpush1.xpose.msra.mxu0 0.0
      %382 = vmatprep.subr.mxu0 0.0
      %383 = vmatpush1.xpose.msra.mxu0 0.0
      %384 = vmatprep.subr.mxu0 0.0
      %385 = vmatpush1.xpose.msra.mxu0 0.0
      %386 = vmatprep.subr.mxu0 0.0
      %387 = vmatpush1.xpose.msra.mxu0 0.0
      %388 = vmatprep.subr.mxu0 0.0
      %389 = vmatpush1.xpose.msra.mxu0 0.0
      %390 = vmatprep.subr.mxu0 0.0
      %391 = vmatpush1.xpose.msra.mxu0 0.0
      %392 = vmatprep.subr.mxu0 0.0
      %393 = vmatpush1.xpose.msra.mxu0 0.0
      %394 = vmatprep.subr.mxu0 0.0
      %395 = vmatpush1.xpose.msra.mxu0 %v364
      %396 = vmatprep.subr.mxu0 0.0
      %397 = vmatpush1.xpose.msra.mxu0 %v361
      %398 = vmatprep.subr.mxu0 0.0
      %399 = vmatpush2.xpose.msra.mxu0 0.0
      %400 = vmatprep.subr.mxu0 0.0
      %401 = vmatpush2.xpose.msra.mxu0 0.0
      %402 = vmatprep.subr.mxu0 0.0
      %403 = vmatpush2.xpose.msra.mxu0 0.0
      %404 = vmatprep.subr.mxu0 0.0
      %405 = vmatpush2.xpose.msra.mxu0 0.0
      %406 = vmatprep.subr.mxu0 0.0
      %407 = vmatpush2.xpose.msra.mxu0 0.0
      %408 = vmatprep.subr.mxu0 0.0
      %409 = vmatpush2.xpose.msra.mxu0 0.0
      %410 = vmatprep.subr.mxu0 0.0
      %411 = vmatpush2.xpose.msra.mxu0 0.0
      %412 = vmatprep.subr.mxu0 0.0
      %413 = vmatpush2.xpose.msra.mxu0 0.0
      %414 = vmatprep.subr.mxu0 0.0
      %415 = vmatpush2.xpose.msra.mxu0 0.0
      %416 = vmatprep.subr.mxu0 0.0
      %417 = vmatpush2.xpose.msra.mxu0 0.0
      %418 = vmatprep.subr.mxu0 0.0
      %419 = vmatpush2.xpose.msra.mxu0 0.0
      %420 = vmatprep.subr.mxu0 0.0
      %421 = vmatpush2.xpose.msra.mxu0 0.0
      %422 = vmatprep.subr.mxu0 0.0
      %423 = vmatpush2.xpose.msra.mxu0 0.0
      %424 = vmatprep.subr.mxu0 0.0
      %425 = vmatpush2.xpose.msra.mxu0 0.0
      %426 = vmatprep.subr.mxu0 0.0
      %427 = vmatpush2.xpose.msra.mxu0 0.0
      %428 = vmatprep.subr.mxu0 0.0
      %429 = vmatpush2.xpose.msra.mxu0 0.0
      %430 = vmatprep.mubr.f32.mxu0 0.0
      %431 = vmatmul.mubr.f32.gmra.mxu0 %v361
      %v432 = vpop.f32.mrf.mxu0
      %v433 = vadd.f32 0.0, %v432
      %v434 = vpop.f32.mrf.mxu0
      %435 = vmatprep.mubr.f32.mxu0 0.0
      %436 = vmatmul.mubr.f32.gmra.mxu0 %v364
      %v437 = vpop.f32.mrf.mxu0
      %v438 = vadd.f32 0.0, %v437
      %v439 = vpop.f32.mrf.mxu0
      %440 = vdwg.mxu0
      %v442 = vsel %vm273, %v252, 0
      %v445 = vsel %vm273, %v253, 0
      %447 = vmatprep.subr.mxu0 0.0
      %448 = vmatpush1.xpose.msra.mxu0 0.0
      %449 = vmatprep.subr.mxu0 0.0
      %450 = vmatpush1.xpose.msra.mxu0 0.0
      %451 = vmatprep.subr.mxu0 0.0
      %452 = vmatpush1.xpose.msra.mxu0 0.0
      %453 = vmatprep.subr.mxu0 0.0
      %454 = vmatpush1.xpose.msra.mxu0 0.0
      %455 = vmatprep.subr.mxu0 0.0
      %456 = vmatpush1.xpose.msra.mxu0 0.0
      %457 = vmatprep.subr.mxu0 0.0
      %458 = vmatpush1.xpose.msra.mxu0 0.0
      %459 = vmatprep.subr.mxu0 0.0
      %460 = vmatpush1.xpose.msra.mxu0 0.0
      %461 = vmatprep.subr.mxu0 0.0
      %462 = vmatpush1.xpose.msra.mxu0 0.0
      %463 = vmatprep.subr.mxu0 0.0
      %464 = vmatpush1.xpose.msra.mxu0 0.0
      %465 = vmatprep.subr.mxu0 0.0
      %466 = vmatpush1.xpose.msra.mxu0 0.0
      %467 = vmatprep.subr.mxu0 0.0
      %468 = vmatpush1.xpose.msra.mxu0 0.0
      %469 = vmatprep.subr.mxu0 0.0
      %470 = vmatpush1.xpose.msra.mxu0 0.0
      %471 = vmatprep.subr.mxu0 0.0
      %472 = vmatpush1.xpose.msra.mxu0 0.0
      %473 = vmatprep.subr.mxu0 0.0
      %474 = vmatpush1.xpose.msra.mxu0 0.0
      %475 = vmatprep.subr.mxu0 0.0
      %476 = vmatpush1.xpose.msra.mxu0 %v445
      %477 = vmatprep.subr.mxu0 0.0
      %478 = vmatpush1.xpose.msra.mxu0 %v442
      %479 = vmatprep.subr.mxu0 0.0
      %480 = vmatpush2.xpose.msra.mxu0 0.0
      %481 = vmatprep.subr.mxu0 0.0
      %482 = vmatpush2.xpose.msra.mxu0 0.0
      %483 = vmatprep.subr.mxu0 0.0
      %484 = vmatpush2.xpose.msra.mxu0 0.0
      %485 = vmatprep.subr.mxu0 0.0
      %486 = vmatpush2.xpose.msra.mxu0 0.0
      %487 = vmatprep.subr.mxu0 0.0
      %488 = vmatpush2.xpose.msra.mxu0 0.0
      %489 = vmatprep.subr.mxu0 0.0
      %490 = vmatpush2.xpose.msra.mxu0 0.0
      %491 = vmatprep.subr.mxu0 0.0
      %492 = vmatpush2.xpose.msra.mxu0 0.0
      %493 = vmatprep.subr.mxu0 0.0
      %494 = vmatpush2.xpose.msra.mxu0 0.0
      %495 = vmatprep.subr.mxu0 0.0
      %496 = vmatpush2.xpose.msra.mxu0 0.0
      %497 = vmatprep.subr.mxu0 0.0
      %498 = vmatpush2.xpose.msra.mxu0 0.0
      %499 = vmatprep.subr.mxu0 0.0
      %500 = vmatpush2.xpose.msra.mxu0 0.0
      %501 = vmatprep.subr.mxu0 0.0
      %502 = vmatpush2.xpose.msra.mxu0 0.0
      %503 = vmatprep.subr.mxu0 0.0
      %504 = vmatpush2.xpose.msra.mxu0 0.0
      %505 = vmatprep.subr.mxu0 0.0
      %506 = vmatpush2.xpose.msra.mxu0 0.0
      %507 = vmatprep.subr.mxu0 0.0
      %508 = vmatpush2.xpose.msra.mxu0 0.0
      %509 = vmatprep.subr.mxu0 0.0
      %510 = vmatpush2.xpose.msra.mxu0 0.0
      %511 = vmatprep.mubr.f32.mxu0 0.0
      %512 = vmatmul.mubr.f32.gmra.mxu0 %v442
      %v513 = vpop.f32.mrf.mxu0
      %v514 = vadd.f32 0.0, %v513
      %v515 = vpop.f32.mrf.mxu0
      %516 = vmatprep.mubr.f32.mxu0 0.0
      %517 = vmatmul.mubr.f32.gmra.mxu0 %v445
      %v518 = vpop.f32.mrf.mxu0
      %v519 = vadd.f32 0.0, %v518
      %v520 = vpop.f32.mrf.mxu0
      %521 = vdwg.mxu0
      %v523 = vsel %vm273, %v254, 0
      %v526 = vsel %vm273, %v255, 0
      %528 = vmatprep.subr.mxu0 0.0
      %529 = vmatpush1.xpose.msra.mxu0 0.0
      %530 = vmatprep.subr.mxu0 0.0
      %531 = vmatpush1.xpose.msra.mxu0 0.0
      %532 = vmatprep.subr.mxu0 0.0
      %533 = vmatpush1.xpose.msra.mxu0 0.0
      %534 = vmatprep.subr.mxu0 0.0
      %535 = vmatpush1.xpose.msra.mxu0 0.0
      %536 = vmatprep.subr.mxu0 0.0
      %537 = vmatpush1.xpose.msra.mxu0 0.0
      %538 = vmatprep.subr.mxu0 0.0
      %539 = vmatpush1.xpose.msra.mxu0 0.0
      %540 = vmatprep.subr.mxu0 0.0
      %541 = vmatpush1.xpose.msra.mxu0 0.0
      %542 = vmatprep.subr.mxu0 0.0
      %543 = vmatpush1.xpose.msra.mxu0 0.0
      %544 = vmatprep.subr.mxu0 0.0
      %545 = vmatpush1.xpose.msra.mxu0 0.0
      %546 = vmatprep.subr.mxu0 0.0
      %547 = vmatpush1.xpose.msra.mxu0 0.0
      %548 = vmatprep.subr.mxu0 0.0
      %549 = vmatpush1.xpose.msra.mxu0 0.0
      %550 = vmatprep.subr.mxu0 0.0
      %551 = vmatpush1.xpose.msra.mxu0 0.0
      %552 = vmatprep.subr.mxu0 0.0
      %553 = vmatpush1.xpose.msra.mxu0 0.0
      %554 = vmatprep.subr.mxu0 0.0
      %555 = vmatpush1.xpose.msra.mxu0 0.0
      %556 = vmatprep.subr.mxu0 0.0
      %557 = vmatpush1.xpose.msra.mxu0 %v526
      %558 = vmatprep.subr.mxu0 0.0
      %559 = vmatpush1.xpose.msra.mxu0 %v523
      %560 = vmatprep.subr.mxu0 0.0
      %561 = vmatpush2.xpose.msra.mxu0 0.0
      %562 = vmatprep.subr.mxu0 0.0
      %563 = vmatpush2.xpose.msra.mxu0 0.0
      %564 = vmatprep.subr.mxu0 0.0
      %565 = vmatpush2.xpose.msra.mxu0 0.0
      %566 = vmatprep.subr.mxu0 0.0
      %567 = vmatpush2.xpose.msra.mxu0 0.0
      %568 = vmatprep.subr.mxu0 0.0
      %569 = vmatpush2.xpose.msra.mxu0 0.0
      %570 = vmatprep.subr.mxu0 0.0
      %571 = vmatpush2.xpose.msra.mxu0 0.0
      %572 = vmatprep.subr.mxu0 0.0
      %573 = vmatpush2.xpose.msra.mxu0 0.0
      %574 = vmatprep.subr.mxu0 0.0
      %575 = vmatpush2.xpose.msra.mxu0 0.0
      %576 = vmatprep.subr.mxu0 0.0
      %577 = vmatpush2.xpose.msra.mxu0 0.0
      %578 = vmatprep.subr.mxu0 0.0
      %579 = vmatpush2.xpose.msra.mxu0 0.0
      %580 = vmatprep.subr.mxu0 0.0
      %581 = vmatpush2.xpose.msra.mxu0 0.0
      %582 = vmatprep.subr.mxu0 0.0
      %583 = vmatpush2.xpose.msra.mxu0 0.0
      %584 = vmatprep.subr.mxu0 0.0
      %585 = vmatpush2.xpose.msra.mxu0 0.0
      %586 = vmatprep.subr.mxu0 0.0
      %587 = vmatpush2.xpose.msra.mxu0 0.0
      %588 = vmatprep.subr.mxu0 0.0
      %589 = vmatpush2.xpose.msra.mxu0 0.0
      %590 = vmatprep.subr.mxu0 0.0
      %591 = vmatpush2.xpose.msra.mxu0 0.0
      %592 = vmatprep.mubr.f32.mxu0 0.0
      %593 = vmatmul.mubr.f32.gmra.mxu0 %v523
      %v594 = vpop.f32.mrf.mxu0
      %v595 = vadd.f32 0.0, %v594
      %v596 = vpop.f32.mrf.mxu0
      %597 = vmatprep.mubr.f32.mxu0 0.0
      %598 = vmatmul.mubr.f32.gmra.mxu0 %v526
      %v599 = vpop.f32.mrf.mxu0
      %v600 = vadd.f32 0.0, %v599
      %v601 = vpop.f32.mrf.mxu0
      %602 = vdwg.mxu0
      %v604 = vsel %vm273, %v256, 0
      %v607 = vsel %vm273, %v257, 0
      %609 = vmatprep.subr.mxu0 0.0
      %610 = vmatpush1.xpose.msra.mxu0 0.0
      %611 = vmatprep.subr.mxu0 0.0
      %612 = vmatpush1.xpose.msra.mxu0 0.0
      %613 = vmatprep.subr.mxu0 0.0
      %614 = vmatpush1.xpose.msra.mxu0 0.0
      %615 = vmatprep.subr.mxu0 0.0
      %616 = vmatpush1.xpose.msra.mxu0 0.0
      %617 = vmatprep.subr.mxu0 0.0
      %618 = vmatpush1.xpose.msra.mxu0 0.0
      %619 = vmatprep.subr.mxu0 0.0
      %620 = vmatpush1.xpose.msra.mxu0 0.0
      %621 = vmatprep.subr.mxu0 0.0
      %622 = vmatpush1.xpose.msra.mxu0 0.0
      %623 = vmatprep.subr.mxu0 0.0
      %624 = vmatpush1.xpose.msra.mxu0 0.0
      %625 = vmatprep.subr.mxu0 0.0
      %626 = vmatpush1.xpose.msra.mxu0 0.0
      %627 = vmatprep.subr.mxu0 0.0
      %628 = vmatpush1.xpose.msra.mxu0 0.0
      %629 = vmatprep.subr.mxu0 0.0
      %630 = vmatpush1.xpose.msra.mxu0 0.0
      %631 = vmatprep.subr.mxu0 0.0
      %632 = vmatpush1.xpose.msra.mxu0 0.0
      %633 = vmatprep.subr.mxu0 0.0
      %634 = vmatpush1.xpose.msra.mxu0 0.0
      %635 = vmatprep.subr.mxu0 0.0
      %636 = vmatpush1.xpose.msra.mxu0 0.0
      %637 = vmatprep.subr.mxu0 0.0
      %638 = vmatpush1.xpose.msra.mxu0 %v607
      %639 = vmatprep.subr.mxu0 0.0
      %640 = vmatpush1.xpose.msra.mxu0 %v604
      %641 = vmatprep.subr.mxu0 0.0
      %642 = vmatpush2.xpose.msra.mxu0 0.0
      %643 = vmatprep.subr.mxu0 0.0
      %644 = vmatpush2.xpose.msra.mxu0 0.0
      %645 = vmatprep.subr.mxu0 0.0
      %646 = vmatpush2.xpose.msra.mxu0 0.0
      %647 = vmatprep.subr.mxu0 0.0
      %648 = vmatpush2.xpose.msra.mxu0 0.0
      %649 = vmatprep.subr.mxu0 0.0
      %650 = vmatpush2.xpose.msra.mxu0 0.0
      %651 = vmatprep.subr.mxu0 0.0
      %652 = vmatpush2.xpose.msra.mxu0 0.0
      %653 = vmatprep.subr.mxu0 0.0
      %654 = vmatpush2.xpose.msra.mxu0 0.0
      %655 = vmatprep.subr.mxu0 0.0
      %656 = vmatpush2.xpose.msra.mxu0 0.0
      %657 = vmatprep.subr.mxu0 0.0
      %658 = vmatpush2.xpose.msra.mxu0 0.0
      %659 = vmatprep.subr.mxu0 0.0
      %660 = vmatpush2.xpose.msra.mxu0 0.0
      %661 = vmatprep.subr.mxu0 0.0
      %662 = vmatpush2.xpose.msra.mxu0 0.0
      %663 = vmatprep.subr.mxu0 0.0
      %664 = vmatpush2.xpose.msra.mxu0 0.0
      %665 = vmatprep.subr.mxu0 0.0
      %666 = vmatpush2.xpose.msra.mxu0 0.0
      %667 = vmatprep.subr.mxu0 0.0
      %668 = vmatpush2.xpose.msra.mxu0 0.0
      %669 = vmatprep.subr.mxu0 0.0
      %670 = vmatpush2.xpose.msra.mxu0 0.0
      %671 = vmatprep.subr.mxu0 0.0
      %672 = vmatpush2.xpose.msra.mxu0 0.0
      %673 = vmatprep.mubr.f32.mxu0 0.0
      %674 = vmatmul.mubr.f32.gmra.mxu0 %v604
      %v675 = vpop.f32.mrf.mxu0
      %v676 = vadd.f32 0.0, %v675
      %v677 = vpop.f32.mrf.mxu0
      %678 = vmatprep.mubr.f32.mxu0 0.0
      %679 = vmatmul.mubr.f32.gmra.mxu0 %v607
      %v680 = vpop.f32.mrf.mxu0
      %v681 = vadd.f32 0.0, %v680
      %v682 = vpop.f32.mrf.mxu0
      %683 = vdwg.mxu0
      %v685 = vsel %vm273, %v258, 0
      %v688 = vsel %vm273, %v259, 0
      %690 = vmatprep.subr.mxu0 0.0
      %691 = vmatpush1.xpose.msra.mxu0 0.0
      %692 = vmatprep.subr.mxu0 0.0
      %693 = vmatpush1.xpose.msra.mxu0 0.0
      %694 = vmatprep.subr.mxu0 0.0
      %695 = vmatpush1.xpose.msra.mxu0 0.0
      %696 = vmatprep.subr.mxu0 0.0
      %697 = vmatpush1.xpose.msra.mxu0 0.0
      %698 = vmatprep.subr.mxu0 0.0
      %699 = vmatpush1.xpose.msra.mxu0 0.0
      %700 = vmatprep.subr.mxu0 0.0
      %701 = vmatpush1.xpose.msra.mxu0 0.0
      %702 = vmatprep.subr.mxu0 0.0
      %703 = vmatpush1.xpose.msra.mxu0 0.0
      %704 = vmatprep.subr.mxu0 0.0
      %705 = vmatpush1.xpose.msra.mxu0 0.0
      %706 = vmatprep.subr.mxu0 0.0
      %707 = vmatpush1.xpose.msra.mxu0 0.0
      %708 = vmatprep.subr.mxu0 0.0
      %709 = vmatpush1.xpose.msra.mxu0 0.0
      %710 = vmatprep.subr.mxu0 0.0
      %711 = vmatpush1.xpose.msra.mxu0 0.0
      %712 = vmatprep.subr.mxu0 0.0
      %713 = vmatpush1.xpose.msra.mxu0 0.0
      %714 = vmatprep.subr.mxu0 0.0
      %715 = vmatpush1.xpose.msra.mxu0 0.0
      %716 = vmatprep.subr.mxu0 0.0
      %717 = vmatpush1.xpose.msra.mxu0 0.0
      %718 = vmatprep.subr.mxu0 0.0
      %719 = vmatpush1.xpose.msra.mxu0 %v688
      %720 = vmatprep.subr.mxu0 0.0
      %721 = vmatpush1.xpose.msra.mxu0 %v685
      %722 = vmatprep.subr.mxu0 0.0
      %723 = vmatpush2.xpose.msra.mxu0 0.0
      %724 = vmatprep.subr.mxu0 0.0
      %725 = vmatpush2.xpose.msra.mxu0 0.0
      %726 = vmatprep.subr.mxu0 0.0
      %727 = vmatpush2.xpose.msra.mxu0 0.0
      %728 = vmatprep.subr.mxu0 0.0
      %729 = vmatpush2.xpose.msra.mxu0 0.0
      %730 = vmatprep.subr.mxu0 0.0
      %731 = vmatpush2.xpose.msra.mxu0 0.0
      %732 = vmatprep.subr.mxu0 0.0
      %733 = vmatpush2.xpose.msra.mxu0 0.0
      %734 = vmatprep.subr.mxu0 0.0
      %735 = vmatpush2.xpose.msra.mxu0 0.0
      %736 = vmatprep.subr.mxu0 0.0
      %737 = vmatpush2.xpose.msra.mxu0 0.0
      %738 = vmatprep.subr.mxu0 0.0
      %739 = vmatpush2.xpose.msra.mxu0 0.0
      %740 = vmatprep.subr.mxu0 0.0
      %741 = vmatpush2.xpose.msra.mxu0 0.0
      %742 = vmatprep.subr.mxu0 0.0
      %743 = vmatpush2.xpose.msra.mxu0 0.0
      %744 = vmatprep.subr.mxu0 0.0
      %745 = vmatpush2.xpose.msra.mxu0 0.0
      %746 = vmatprep.subr.mxu0 0.0
      %747 = vmatpush2.xpose.msra.mxu0 0.0
      %748 = vmatprep.subr.mxu0 0.0
      %749 = vmatpush2.xpose.msra.mxu0 0.0
      %750 = vmatprep.subr.mxu0 0.0
      %751 = vmatpush2.xpose.msra.mxu0 0.0
      %752 = vmatprep.subr.mxu0 0.0
      %753 = vmatpush2.xpose.msra.mxu0 0.0
      %754 = vmatprep.mubr.f32.mxu0 0.0
      %755 = vmatmul.mubr.f32.gmra.mxu0 %v685
      %v756 = vpop.f32.mrf.mxu0
      %v757 = vadd.f32 0.0, %v756
      %v758 = vpop.f32.mrf.mxu0
      %759 = vmatprep.mubr.f32.mxu0 0.0
      %760 = vmatmul.mubr.f32.gmra.mxu0 %v688
      %v761 = vpop.f32.mrf.mxu0
      %v762 = vadd.f32 0.0, %v761
      %v763 = vpop.f32.mrf.mxu0
      %764 = vdwg.mxu0
      %v766 = vsel %vm273, %v260, 0
      %v769 = vsel %vm273, %v261, 0
      %771 = vmatprep.subr.mxu0 0.0
      %772 = vmatpush1.xpose.msra.mxu0 0.0
      %773 = vmatprep.subr.mxu0 0.0
      %774 = vmatpush1.xpose.msra.mxu0 0.0
      %775 = vmatprep.subr.mxu0 0.0
      %776 = vmatpush1.xpose.msra.mxu0 0.0
      %777 = vmatprep.subr.mxu0 0.0
      %778 = vmatpush1.xpose.msra.mxu0 0.0
      %779 = vmatprep.subr.mxu0 0.0
      %780 = vmatpush1.xpose.msra.mxu0 0.0
      %781 = vmatprep.subr.mxu0 0.0
      %782 = vmatpush1.xpose.msra.mxu0 0.0
      %783 = vmatprep.subr.mxu0 0.0
      %784 = vmatpush1.xpose.msra.mxu0 0.0
      %785 = vmatprep.subr.mxu0 0.0
      %786 = vmatpush1.xpose.msra.mxu0 0.0
      %787 = vmatprep.subr.mxu0 0.0
      %788 = vmatpush1.xpose.msra.mxu0 0.0
      %789 = vmatprep.subr.mxu0 0.0
      %790 = vmatpush1.xpose.msra.mxu0 0.0
      %791 = vmatprep.subr.mxu0 0.0
      %792 = vmatpush1.xpose.msra.mxu0 0.0
      %793 = vmatprep.subr.mxu0 0.0
      %794 = vmatpush1.xpose.msra.mxu0 0.0
      %795 = vmatprep.subr.mxu0 0.0
      %796 = vmatpush1.xpose.msra.mxu0 0.0
      %797 = vmatprep.subr.mxu0 0.0
      %798 = vmatpush1.xpose.msra.mxu0 0.0
      %799 = vmatprep.subr.mxu0 0.0
      %800 = vmatpush1.xpose.msra.mxu0 %v769
      %801 = vmatprep.subr.mxu0 0.0
      %802 = vmatpush1.xpose.msra.mxu0 %v766
      %803 = vmatprep.subr.mxu0 0.0
      %804 = vmatpush2.xpose.msra.mxu0 0.0
      %805 = vmatprep.subr.mxu0 0.0
      %806 = vmatpush2.xpose.msra.mxu0 0.0
      %807 = vmatprep.subr.mxu0 0.0
      %808 = vmatpush2.xpose.msra.mxu0 0.0
      %809 = vmatprep.subr.mxu0 0.0
      %810 = vmatpush2.xpose.msra.mxu0 0.0
      %811 = vmatprep.subr.mxu0 0.0
      %812 = vmatpush2.xpose.msra.mxu0 0.0
      %813 = vmatprep.subr.mxu0 0.0
      %814 = vmatpush2.xpose.msra.mxu0 0.0
      %815 = vmatprep.subr.mxu0 0.0
      %816 = vmatpush2.xpose.msra.mxu0 0.0
      %817 = vmatprep.subr.mxu0 0.0
      %818 = vmatpush2.xpose.msra.mxu0 0.0
      %819 = vmatprep.subr.mxu0 0.0
      %820 = vmatpush2.xpose.msra.mxu0 0.0
      %821 = vmatprep.subr.mxu0 0.0
      %822 = vmatpush2.xpose.msra.mxu0 0.0
      %823 = vmatprep.subr.mxu0 0.0
      %824 = vmatpush2.xpose.msra.mxu0 0.0
      %825 = vmatprep.subr.mxu0 0.0
      %826 = vmatpush2.xpose.msra.mxu0 0.0
      %827 = vmatprep.subr.mxu0 0.0
      %828 = vmatpush2.xpose.msra.mxu0 0.0
      %829 = vmatprep.subr.mxu0 0.0
      %830 = vmatpush2.xpose.msra.mxu0 0.0
      %831 = vmatprep.subr.mxu0 0.0
      %832 = vmatpush2.xpose.msra.mxu0 0.0
      %833 = vmatprep.subr.mxu0 0.0
      %834 = vmatpush2.xpose.msra.mxu0 0.0
      %835 = vmatprep.mubr.f32.mxu0 0.0
      %836 = vmatmul.mubr.f32.gmra.mxu0 %v766
      %v837 = vpop.f32.mrf.mxu0
      %v838 = vadd.f32 0.0, %v837
      %v839 = vpop.f32.mrf.mxu0
      %840 = vmatprep.mubr.f32.mxu0 0.0
      %841 = vmatmul.mubr.f32.gmra.mxu0 %v769
      %v842 = vpop.f32.mrf.mxu0
      %v843 = vadd.f32 0.0, %v842
      %v844 = vpop.f32.mrf.mxu0
      %845 = vdwg.mxu0
      %v847 = vsel %vm273, %v262, 0
      %v850 = vsel %vm273, %v263, 0
      %852 = vmatprep.subr.mxu0 0.0
      %853 = vmatpush1.xpose.msra.mxu0 0.0
      %854 = vmatprep.subr.mxu0 0.0
      %855 = vmatpush1.xpose.msra.mxu0 0.0
      %856 = vmatprep.subr.mxu0 0.0
      %857 = vmatpush1.xpose.msra.mxu0 0.0
      %858 = vmatprep.subr.mxu0 0.0
      %859 = vmatpush1.xpose.msra.mxu0 0.0
      %860 = vmatprep.subr.mxu0 0.0
      %861 = vmatpush1.xpose.msra.mxu0 0.0
      %862 = vmatprep.subr.mxu0 0.0
      %863 = vmatpush1.xpose.msra.mxu0 0.0
      %864 = vmatprep.subr.mxu0 0.0
      %865 = vmatpush1.xpose.msra.mxu0 0.0
      %866 = vmatprep.subr.mxu0 0.0
      %867 = vmatpush1.xpose.msra.mxu0 0.0
      %868 = vmatprep.subr.mxu0 0.0
      %869 = vmatpush1.xpose.msra.mxu0 0.0
      %870 = vmatprep.subr.mxu0 0.0
      %871 = vmatpush1.xpose.msra.mxu0 0.0
      %872 = vmatprep.subr.mxu0 0.0
      %873 = vmatpush1.xpose.msra.mxu0 0.0
      %874 = vmatprep.subr.mxu0 0.0
      %875 = vmatpush1.xpose.msra.mxu0 0.0
      %876 = vmatprep.subr.mxu0 0.0
      %877 = vmatpush1.xpose.msra.mxu0 0.0
      %878 = vmatprep.subr.mxu0 0.0
      %879 = vmatpush1.xpose.msra.mxu0 0.0
      %880 = vmatprep.subr.mxu0 0.0
      %881 = vmatpush1.xpose.msra.mxu0 %v850
      %882 = vmatprep.subr.mxu0 0.0
      %883 = vmatpush1.xpose.msra.mxu0 %v847
      %884 = vmatprep.subr.mxu0 0.0
      %885 = vmatpush2.xpose.msra.mxu0 0.0
      %886 = vmatprep.subr.mxu0 0.0
      %887 = vmatpush2.xpose.msra.mxu0 0.0
      %888 = vmatprep.subr.mxu0 0.0
      %889 = vmatpush2.xpose.msra.mxu0 0.0
      %890 = vmatprep.subr.mxu0 0.0
      %891 = vmatpush2.xpose.msra.mxu0 0.0
      %892 = vmatprep.subr.mxu0 0.0
      %893 = vmatpush2.xpose.msra.mxu0 0.0
      %894 = vmatprep.subr.mxu0 0.0
      %895 = vmatpush2.xpose.msra.mxu0 0.0
      %896 = vmatprep.subr.mxu0 0.0
      %897 = vmatpush2.xpose.msra.mxu0 0.0
      %898 = vmatprep.subr.mxu0 0.0
      %899 = vmatpush2.xpose.msra.mxu0 0.0
      %900 = vmatprep.subr.mxu0 0.0
      %901 = vmatpush2.xpose.msra.mxu0 0.0
      %902 = vmatprep.subr.mxu0 0.0
      %903 = vmatpush2.xpose.msra.mxu0 0.0
      %904 = vmatprep.subr.mxu0 0.0
      %905 = vmatpush2.xpose.msra.mxu0 0.0
      %906 = vmatprep.subr.mxu0 0.0
      %907 = vmatpush2.xpose.msra.mxu0 0.0
      %908 = vmatprep.subr.mxu0 0.0
      %909 = vmatpush2.xpose.msra.mxu0 0.0
      %910 = vmatprep.subr.mxu0 0.0
      %911 = vmatpush2.xpose.msra.mxu0 0.0
      %912 = vmatprep.subr.mxu0 0.0
      %913 = vmatpush2.xpose.msra.mxu0 0.0
      %914 = vmatprep.subr.mxu0 0.0
      %915 = vmatpush2.xpose.msra.mxu0 0.0
      %916 = vmatprep.mubr.f32.mxu0 0.0
      %917 = vmatmul.mubr.f32.gmra.mxu0 %v847
      %v918 = vpop.f32.mrf.mxu0
      %v919 = vadd.f32 0.0, %v918
      %v920 = vpop.f32.mrf.mxu0
      %921 = vmatprep.mubr.f32.mxu0 0.0
      %922 = vmatmul.mubr.f32.gmra.mxu0 %v850
      %v923 = vpop.f32.mrf.mxu0
      %v924 = vadd.f32 0.0, %v923
      %v925 = vpop.f32.mrf.mxu0
      %926 = vdwg.mxu0
      %v927 = vmul.f32 %v248, %v248
      %v928 = vmul.f32 %v249, %v249
      %v929 = vmul.f32 %v250, %v250
      %v930 = vmul.f32 %v251, %v251
      %v931 = vmul.f32 %v252, %v252
      %v932 = vmul.f32 %v253, %v253
      %v933 = vmul.f32 %v254, %v254
      %v934 = vmul.f32 %v255, %v255
      %v935 = vmul.f32 %v256, %v256
      %v936 = vmul.f32 %v257, %v257
      %v937 = vmul.f32 %v258, %v258
      %v938 = vmul.f32 %v259, %v259
      %v939 = vmul.f32 %v260, %v260
      %v940 = vmul.f32 %v261, %v261
      %v941 = vmul.f32 %v262, %v262
      %v942 = vmul.f32 %v263, %v263
      %v943 = vsel %vm273, %v927, 0.0
      %944 = vadd.xlane.f32.xlu0 %v943
      %v945 = vpop.xlane.xlu0 %944
      %v946 = vsel %vm273, %v928, 0.0
      %947 = vadd.xlane.f32.xlu0 %v946
      %v948 = vpop.xlane.xlu0 %947
      %v949 = vsel %vm273, %v929, 0.0
      %950 = vadd.xlane.f32.xlu0 %v949
      %v951 = vpop.xlane.xlu0 %950
      %v952 = vsel %vm273, %v930, 0.0
      %953 = vadd.xlane.f32.xlu0 %v952
      %v954 = vpop.xlane.xlu0 %953
      %v955 = vsel %vm273, %v931, 0.0
      %956 = vadd.xlane.f32.xlu0 %v955
      %v957 = vpop.xlane.xlu0 %956
      %v958 = vsel %vm273, %v932, 0.0
      %959 = vadd.xlane.f32.xlu0 %v958
      %v960 = vpop.xlane.xlu0 %959
      %v961 = vsel %vm273, %v933, 0.0
      %962 = vadd.xlane.f32.xlu0 %v961
      %v963 = vpop.xlane.xlu0 %962
      %v964 = vsel %vm273, %v934, 0.0
      %965 = vadd.xlane.f32.xlu0 %v964
      %v966 = vpop.xlane.xlu0 %965
      %v967 = vsel %vm273, %v935, 0.0
      %968 = vadd.xlane.f32.xlu0 %v967
      %v969 = vpop.xlane.xlu0 %968
      %v970 = vsel %vm273, %v936, 0.0
      %971 = vadd.xlane.f32.xlu0 %v970
      %v972 = vpop.xlane.xlu0 %971
      %v973 = vsel %vm273, %v937, 0.0
      %974 = vadd.xlane.f32.xlu0 %v973
      %v975 = vpop.xlane.xlu0 %974
      %v976 = vsel %vm273, %v938, 0.0
      %977 = vadd.xlane.f32.xlu0 %v976
      %v978 = vpop.xlane.xlu0 %977
      %v979 = vsel %vm273, %v939, 0.0
      %980 = vadd.xlane.f32.xlu0 %v979
      %v981 = vpop.xlane.xlu0 %980
      %v982 = vsel %vm273, %v940, 0.0
      %983 = vadd.xlane.f32.xlu0 %v982
      %v984 = vpop.xlane.xlu0 %983
      %v985 = vsel %vm273, %v941, 0.0
      %986 = vadd.xlane.f32.xlu0 %v985
      %v987 = vpop.xlane.xlu0 %986
      %v988 = vsel %vm273, %v942, 0.0
      %989 = vadd.xlane.f32.xlu0 %v988
      %v990 = vpop.xlane.xlu0 %989
      %v1007 = vlaneseq
      %v1008 = vshrl.u32 %v1007, 7
      %v1009 = vsub.s32 %v265, %v1008
      %v1010 = vrot.slane %v945, %v1009
      %v1011 = vadd.s32 %v265, 4294967288
      %v1012 = vlaneseq
      %v1013 = vshrl.u32 %v1012, 7
      %v1014 = vsub.s32 %v1011, %v1013
      %v1015 = vrot.slane %v948, %v1014
      %vm1016 = vcmask 130112
      %v1017 = vsel %vm1016, %v1015, %v1010
      %v1018 = vlaneseq
      %v1019 = vshrl.u32 %v1018, 7
      %v1020 = vsub.s32 %v265, %v1019
      %v1021 = vrot.slane %v951, %v1020
      %v1022 = vlaneseq
      %v1023 = vshrl.u32 %v1022, 7
      %v1024 = vsub.s32 %v1011, %v1023
      %v1025 = vrot.slane %v954, %v1024
      %v1026 = vsel %vm1016, %v1025, %v1021
      %v1027 = vlaneseq
      %v1028 = vshrl.u32 %v1027, 7
      %v1029 = vsub.s32 %v265, %v1028
      %v1030 = vrot.slane %v957, %v1029
      %v1031 = vlaneseq
      %v1032 = vshrl.u32 %v1031, 7
      %v1033 = vsub.s32 %v1011, %v1032
      %v1034 = vrot.slane %v960, %v1033
      %v1035 = vsel %vm1016, %v1034, %v1030
      %v1036 = vlaneseq
      %v1037 = vshrl.u32 %v1036, 7
      %v1038 = vsub.s32 %v265, %v1037
      %v1039 = vrot.slane %v963, %v1038
      %v1040 = vlaneseq
      %v1041 = vshrl.u32 %v1040, 7
      %v1042 = vsub.s32 %v1011, %v1041
      %v1043 = vrot.slane %v966, %v1042
      %v1044 = vsel %vm1016, %v1043, %v1039
      %v1045 = vlaneseq
      %v1046 = vshrl.u32 %v1045, 7
      %v1047 = vsub.s32 %v265, %v1046
      %v1048 = vrot.slane %v969, %v1047
      %v1049 = vlaneseq
      %v1050 = vshrl.u32 %v1049, 7
      %v1051 = vsub.s32 %v1011, %v1050
      %v1052 = vrot.slane %v972, %v1051
      %v1053 = vsel %vm1016, %v1052, %v1048
      %v1054 = vlaneseq
      %v1055 = vshrl.u32 %v1054, 7
      %v1056 = vsub.s32 %v265, %v1055
      %v1057 = vrot.slane %v975, %v1056
      %v1058 = vlaneseq
      %v1059 = vshrl.u32 %v1058, 7
      %v1060 = vsub.s32 %v1011, %v1059
      %v1061 = vrot.slane %v978, %v1060
      %v1062 = vsel %vm1016, %v1061, %v1057
      %v1063 = vlaneseq
      %v1064 = vshrl.u32 %v1063, 7
      %v1065 = vsub.s32 %v265, %v1064
      %v1066 = vrot.slane %v981, %v1065
      %v1067 = vlaneseq
      %v1068 = vshrl.u32 %v1067, 7
      %v1069 = vsub.s32 %v1011, %v1068
      %v1070 = vrot.slane %v984, %v1069
      %v1071 = vsel %vm1016, %v1070, %v1066
      %v1072 = vlaneseq
      %v1073 = vshrl.u32 %v1072, 7
      %v1074 = vsub.s32 %v265, %v1073
      %v1075 = vrot.slane %v987, %v1074
      %v1076 = vlaneseq
      %v1077 = vshrl.u32 %v1076, 7
      %v1078 = vsub.s32 %v1011, %v1077
      %v1079 = vrot.slane %v990, %v1078
      %v1080 = vsel %vm1016, %v1079, %v1075
      %vm1081 = vcmask 1041409
      %v1082 = vsel %vm1081, %v1026, %v1017
      %vm1083 = vcmask 1042434
      %v1084 = vsel %vm1083, %v1035, %v1082
      %vm1085 = vcmask 1043459
      %v1086 = vsel %vm1085, %v1044, %v1084
      %vm1087 = vcmask 1044484
      %v1088 = vsel %vm1087, %v1053, %v1086
      %vm1089 = vcmask 1045509
      %v1090 = vsel %vm1089, %v1062, %v1088
      %vm1091 = vcmask 1046534
      %v1092 = vsel %vm1091, %v1071, %v1090
      %vm1093 = vcmask 1047559
      %v1094 = vsel %vm1093, %v1080, %v1092
      %v1096 = vsel %vm273, %v1094, 0.0
      %1097 = vadd.xlane.f32.xlu0 %v1096
      %v1098 = vpop.xlane.xlu0 %1097
      %v1099 = vmul.f32 %v352, %v352
      %v1100 = vmul.f32 %v357, %v357
      %v1101 = vmul.f32 %v433, %v433
      %v1102 = vmul.f32 %v438, %v438
      %v1103 = vmul.f32 %v514, %v514
      %v1104 = vmul.f32 %v519, %v519
      %v1105 = vmul.f32 %v595, %v595
      %v1106 = vmul.f32 %v600, %v600
      %v1107 = vmul.f32 %v676, %v676
      %v1108 = vmul.f32 %v681, %v681
      %v1109 = vmul.f32 %v757, %v757
      %v1110 = vmul.f32 %v762, %v762
      %v1111 = vmul.f32 %v838, %v838
      %v1112 = vmul.f32 %v843, %v843
      %v1113 = vmul.f32 %v919, %v919
      %v1114 = vmul.f32 %v924, %v924
      %v1115 = vsel %vm273, %v1099, 0.0
      %1116 = vadd.xlane.f32.xlu0 %v1115
      %v1117 = vpop.xlane.xlu0 %1116
      %v1118 = vsel %vm273, %v1100, 0.0
      %1119 = vadd.xlane.f32.xlu0 %v1118
      %v1120 = vpop.xlane.xlu0 %1119
      %v1121 = vsel %vm273, %v1101, 0.0
      %1122 = vadd.xlane.f32.xlu0 %v1121
      %v1123 = vpop.xlane.xlu0 %1122
      %v1124 = vsel %vm273, %v1102, 0.0
      %1125 = vadd.xlane.f32.xlu0 %v1124
      %v1126 = vpop.xlane.xlu0 %1125
      %v1127 = vsel %vm273, %v1103, 0.0
      %1128 = vadd.xlane.f32.xlu0 %v1127
      %v1129 = vpop.xlane.xlu0 %1128
      %v1130 = vsel %vm273, %v1104, 0.0
      %1131 = vadd.xlane.f32.xlu0 %v1130
      %v1132 = vpop.xlane.xlu0 %1131
      %v1133 = vsel %vm273, %v1105, 0.0
      %1134 = vadd.xlane.f32.xlu0 %v1133
      %v1135 = vpop.xlane.xlu0 %1134
      %v1136 = vsel %vm273, %v1106, 0.0
      %1137 = vadd.xlane.f32.xlu0 %v1136
      %v1138 = vpop.xlane.xlu0 %1137
      %v1139 = vsel %vm273, %v1107, 0.0
      %1140 = vadd.xlane.f32.xlu0 %v1139
      %v1141 = vpop.xlane.xlu0 %1140
      %v1142 = vsel %vm273, %v1108, 0.0
      %1143 = vadd.xlane.f32.xlu0 %v1142
      %v1144 = vpop.xlane.xlu0 %1143
      %v1145 = vsel %vm273, %v1109, 0.0
      %1146 = vadd.xlane.f32.xlu0 %v1145
      %v1147 = vpop.xlane.xlu0 %1146
      %v1148 = vsel %vm273, %v1110, 0.0
      %1149 = vadd.xlane.f32.xlu0 %v1148
      %v1150 = vpop.xlane.xlu0 %1149
      %v1151 = vsel %vm273, %v1111, 0.0
      %1152 = vadd.xlane.f32.xlu0 %v1151
      %v1153 = vpop.xlane.xlu0 %1152
      %v1154 = vsel %vm273, %v1112, 0.0
      %1155 = vadd.xlane.f32.xlu0 %v1154
      %v1156 = vpop.xlane.xlu0 %1155
      %v1157 = vsel %vm273, %v1113, 0.0
      %1158 = vadd.xlane.f32.xlu0 %v1157
      %v1159 = vpop.xlane.xlu0 %1158
      %v1160 = vsel %vm273, %v1114, 0.0
      %1161 = vadd.xlane.f32.xlu0 %v1160
      %v1162 = vpop.xlane.xlu0 %1161
      %v1179 = vlaneseq
      %v1180 = vshrl.u32 %v1179, 7
      %v1181 = vsub.s32 %v265, %v1180
      %v1182 = vrot.slane %v1117, %v1181
      %v1183 = vlaneseq
      %v1184 = vshrl.u32 %v1183, 7
      %v1185 = vsub.s32 %v1011, %v1184
      %v1186 = vrot.slane %v1120, %v1185
      %v1187 = vsel %vm1016, %v1186, %v1182
      %v1188 = vlaneseq
      %v1189 = vshrl.u32 %v1188, 7
      %v1190 = vsub.s32 %v265, %v1189
      %v1191 = vrot.slane %v1123, %v1190
      %v1192 = vlaneseq
      %v1193 = vshrl.u32 %v1192, 7
      %v1194 = vsub.s32 %v1011, %v1193
      %v1195 = vrot.slane %v1126, %v1194
      %v1196 = vsel %vm1016, %v1195, %v1191
      %v1197 = vlaneseq
      %v1198 = vshrl.u32 %v1197, 7
      %v1199 = vsub.s32 %v265, %v1198
      %v1200 = vrot.slane %v1129, %v1199
      %v1201 = vlaneseq
      %v1202 = vshrl.u32 %v1201, 7
      %v1203 = vsub.s32 %v1011, %v1202
      %v1204 = vrot.slane %v1132, %v1203
      %v1205 = vsel %vm1016, %v1204, %v1200
      %v1206 = vlaneseq
      %v1207 = vshrl.u32 %v1206, 7
      %v1208 = vsub.s32 %v265, %v1207
      %v1209 = vrot.slane %v1135, %v1208
      %v1210 = vlaneseq
      %v1211 = vshrl.u32 %v1210, 7
      %v1212 = vsub.s32 %v1011, %v1211
      %v1213 = vrot.slane %v1138, %v1212
      %v1214 = vsel %vm1016, %v1213, %v1209
      %v1215 = vlaneseq
      %v1216 = vshrl.u32 %v1215, 7
      %v1217 = vsub.s32 %v265, %v1216
      %v1218 = vrot.slane %v1141, %v1217
      %v1219 = vlaneseq
      %v1220 = vshrl.u32 %v1219, 7
      %v1221 = vsub.s32 %v1011, %v1220
      %v1222 = vrot.slane %v1144, %v1221
      %v1223 = vsel %vm1016, %v1222, %v1218
      %v1224 = vlaneseq
      %v1225 = vshrl.u32 %v1224, 7
      %v1226 = vsub.s32 %v265, %v1225
      %v1227 = vrot.slane %v1147, %v1226
      %v1228 = vlaneseq
      %v1229 = vshrl.u32 %v1228, 7
      %v1230 = vsub.s32 %v1011, %v1229
      %v1231 = vrot.slane %v1150, %v1230
      %v1232 = vsel %vm1016, %v1231, %v1227
      %v1233 = vlaneseq
      %v1234 = vshrl.u32 %v1233, 7
      %v1235 = vsub.s32 %v265, %v1234
      %v1236 = vrot.slane %v1153, %v1235
      %v1237 = vlaneseq
      %v1238 = vshrl.u32 %v1237, 7
      %v1239 = vsub.s32 %v1011, %v1238
      %v1240 = vrot.slane %v1156, %v1239
      %v1241 = vsel %vm1016, %v1240, %v1236
      %v1242 = vlaneseq
      %v1243 = vshrl.u32 %v1242, 7
      %v1244 = vsub.s32 %v265, %v1243
      %v1245 = vrot.slane %v1159, %v1244
      %v1246 = vlaneseq
      %v1247 = vshrl.u32 %v1246, 7
      %v1248 = vsub.s32 %v1011, %v1247
      %v1249 = vrot.slane %v1162, %v1248
      %v1250 = vsel %vm1016, %v1249, %v1245
      %v1251 = vsel %vm1081, %v1196, %v1187
      %v1252 = vsel %vm1083, %v1205, %v1251
      %v1253 = vsel %vm1085, %v1214, %v1252
      %v1254 = vsel %vm1087, %v1223, %v1253
      %v1255 = vsel %vm1089, %v1232, %v1254
      %v1256 = vsel %vm1091, %v1241, %v1255
      %v1257 = vsel %vm1093, %v1250, %v1256
      %v1259 = vsel %vm273, %v1257, 0.0
      %1260 = vadd.xlane.f32.xlu0 %v1259
      %v1261 = vpop.xlane.xlu0 %1260
      %v1262 = vmul.f32 %v1098, 2.0
      %v1263 = vsub.f32 %v1261, %v1262
      %v1264 = vadd.f32 %v1263, 16.0
      %v1265 = vmax.f32 %v1264, 0.0
      %v1266 = vrsqrt.pop %v1265
      %v1267 = vmul.f32 %v1265, %v1266
      %vm1268 = vcmp.eq.f32.partialorder %v1265, inf
      %v1269 = vsel %vm1268, %v1265, %v1267
      %vm1270 = vcmp.eq.f32.partialorder %v1265, 0.0
      %v1271 = vand.u32 %v1265, 2147483648
      %v1272 = vsel %vm1270, %v1271, %v1269
      %1273 = vst.msk [vmem:[%s245] sm:$0xff] %vm277, %v1272
      %p1274 = scmp.lt.s32.totalorder %s16, 2
      %s1275 = scalar_select %p1274, %s16, 2
      %s1276 = smul.addr %s1275, 8
      %s1277 = scalar_lea.vmem %s3, %s1276
      %p1278 = scmp.lt.s32.totalorder %s16, 2
      %s1279 = scalar_select %p1278, %s16, 2
      %s1280 = smul.addr %s1279, 8
      %s1281 = scalar_lea.vmem %s4, %s1280
      // Predicated region
      $region33: #{tpu_custom_call.1} parent=31 // pred_check
        %p1282 = pneg %p112
      $region34: #{tpu_custom_call.1} parent=31 // pred_check_branch
        %1284 = sbr.rel (%p1282) target = $region36
      $region35: #{tpu_custom_call.1} parent=31 // pred_region
        _
      $region36: #{tpu_custom_call.1} parent=31 // pred_fallthru
        _
      // Predicated region
      $region37: #{tpu_custom_call.1} parent=31 // pred_check
        %p1285 = pneg %p138
      $region38: #{tpu_custom_call.1} parent=31 // pred_check_branch
        %1287 = sbr.rel (%p1285) target = $region40
      $region39: #{tpu_custom_call.1} parent=31 // pred_region
        _
      $region40: #{tpu_custom_call.1} parent=31 // pred_fallthru
        _
    $region32: #{tpu_custom_call.1} parent=5 // pred_fallthru
      _
    %p1288 = scmp.le.s32.totalorder 2, %s11
    // Predicated region
    $region41: #{tpu_custom_call.1} parent=5 // pred_check
      %p1289 = pneg %p1288
    $region42: #{tpu_custom_call.1} parent=5 // pred_check_branch
      %1291 = sbr.rel (%p1289) target = $region44
    $region43: #{tpu_custom_call.1} parent=5 // pred_region
      %s1292 = ssub.s32 %s11, 2
      // Predicated region
      $region45: #{tpu_custom_call.1} parent=43 // pred_check
        %p1293 = pneg %p118
      $region46: #{tpu_custom_call.1} parent=43 // pred_check_branch
        %1295 = sbr.rel (%p1293) target = $region48
      $region47: #{tpu_custom_call.1} parent=43 // pred_region
        %p1296 = scmp.lt.s32.totalorder %s17, 2
        %s1297 = scalar_select %p1296, %s17, 2
        %s1298 = smul.addr %s1297, 8
        %s1299 = scalar_lea.vmem %s3, %s1298
      $region48: #{tpu_custom_call.1} parent=43 // pred_fallthru
        _
      // Predicated region
      $region49: #{tpu_custom_call.1} parent=43 // pred_check
        %p1300 = pneg %p144
      $region50: #{tpu_custom_call.1} parent=43 // pred_check_branch
        %1302 = sbr.rel (%p1300) target = $region52
      $region51: #{tpu_custom_call.1} parent=43 // pred_region
        %p1303 = scmp.lt.s32.totalorder %s17, 2
        %s1304 = scalar_select %p1303, %s17, 2
        %s1305 = smul.addr %s1304, 8
        %s1306 = scalar_lea.vmem %s4, %s1305
      $region52: #{tpu_custom_call.1} parent=43 // pred_fallthru
        _
    $region44: #{tpu_custom_call.1} parent=5 // pred_fallthru
      _
  $region6: #{tpu_custom_call.1} parent=0 // loop_footer
    %s15 = sadd.s32 1, %s11
  $region7: #{tpu_custom_call.1} parent=0 // loop_footer_branch
    %10 = sbr.rel target = $region3
  $region8: #{tpu_custom_call.1} parent=0 // loop_exit
    _

</llo_original>
